<compile_context>
chip_gen: v6e
topology: v6e:2x2x1
jax: 0.10.0
libtpu: 0.0.40
codegen_flags: <defaults>
</compile_context>

<pallas_src>
import functools

import numpy as np
import jax
import jax.numpy as jnp
from jax.experimental import pallas as pl
from jax.experimental.pallas import tpu as pltpu

NEG = -1e30  # "-inf" for max-pool padding (representable in bf16)


def _round_up(n, m):
    return ((n + m - 1) // m) * m


def _vmem_capacity_bytes():
    try:
        return int(pltpu.get_tpu_info().vmem_capacity_bytes)
    except Exception:
        return 64 * 1024 * 1024  # conservative: v7x per-TensorCore VMEM


_VMEM_CAP = _vmem_capacity_bytes()
_LARGE_VMEM = _VMEM_CAP >= 128 * 1024 * 1024          # v5e / v6e
_VMEM_LIMIT = int(min(3 * _VMEM_CAP // 4, 100 * 1024 * 1024))
_TILE_BUDGET = max(16 * 1024 * 1024, _VMEM_LIMIT - 8 * 1024 * 1024)


def _gemm_tile_n(n, k, cout):
    """Largest row tile whose double-buffered bf16 operands fit VMEM *and* leaves a grid >= 2."""
    cap = _round_up(max(n, 1), 128)
    # 1024-row tiles only on 128-MiB parts (v5e/v6e); 64-MiB v7x stays <= 512.
    # (On v5e the bigger tile buys little but the extra padded-row waste is < ~1% at real N.)
    candidates = (1024, 512, 256, 128) if _LARGE_VMEM else (512, 256, 128)
    for t in candidates:
        if 2 * t > cap:          # keep >= 2 grid steps: megacore sharding + pipelining
            continue
        vmem = 2 * t * k * 2 + 2 * k * cout * 2 + 2 * t * cout * 2
        if vmem <= _TILE_BUDGET:
            return t
    return 128


def _pool_tile_n(n_out, c):
    cap = _round_up(max(n_out, 1), 128)
    candidates = (2048, 1024, 512, 256, 128) if _LARGE_VMEM else (1024, 512, 256, 128)
    for t in candidates:
        if 2 * t > cap:
            continue
        vmem = 2 * 8 * t * c * 2 + 2 * t * c * 2
        if vmem <= _TILE_BUDGET:
            return t
    return 128


def _pad_c(c):
    """Channel padding policy: multiple of 128 when inflation <= ~33% (exact zero padding)."""
    if c < 128:
        return 128 if c > 64 else c       # 96 -> 128; 3, 64 stay
    pc = _round_up(c, 128)
    return pc if 3 * pc <= 4 * c else c   # 128->128, 160 stays, 192/224/256 -> 256


# ----------------------------- Pallas kernels -----------------------------

def _conv_matmul_kernel(x_ref, w_ref, o_ref):
    # x_ref: (TILE_N, K) bf16   w_ref: (K, Cout) bf16   o_ref: (TILE_N, Cout) bf16
    # bf16 operands at native MXU rate; f32 accumulation via preferred_element_type.
    o_ref[...] = jnp.dot(x_ref[...], w_ref[...],
                         preferred_element_type=jnp.float32).astype(o_ref.dtype)


def gathered_matmul(x, w, tile_n):
    """x: [N_pad, K] bf16, w: [K, Cout] bf16 -> [N_pad, Cout] bf16 (sparse-conv GEMM)."""
    n_pad, k = x.shape
    cout = w.shape[1]
    cost = pl.CostEstimate(
        flops=2 * int(n_pad) * int(k) * int(cout),
        transcendentals=0,
        bytes_accessed=int(n_pad) * int(k) * 2 + int(k) * int(cout) * 2
        + int(n_pad) * int(cout) * 2,
    )
    return pl.pallas_call(
        _conv_matmul_kernel,
        out_shape=jax.ShapeDtypeStruct((n_pad, cout), jnp.bfloat16),
        grid_spec=pltpu.PrefetchScalarGridSpec(
            num_scalar_prefetch=0,
            grid=(n_pad // tile_n,),
            in_specs=[
                pl.BlockSpec((tile_n, k), lambda i: (i, 0)),
                # Weight index_map is constant across the grid: kept resident, not re-DMA'd.
                pl.BlockSpec((k, cout), lambda i: (0, 0)),
            ],
            out_specs=pl.BlockSpec((tile_n, cout), lambda i: (i, 0)),
        ),
        compiler_params=pltpu.CompilerParams(
            dimension_semantics=("parallel",),          # shards N across v7x's 2 TensorCores
            vmem_limit_bytes=_VMEM_LIMIT,
            # Let XLA fuse the im2col gather into the kernel's input pipeline (no HBM copy
            # of the [N, 27*Cin] stream). Weight stays a plain operand.
            allow_input_fusion=[True, False],
        ),
        cost_estimate=cost,
    )(x, w)


def _maxpool_kernel(x_ref, o_ref):
    # x_ref: (8, TILE_N, C) bf16  o_ref: (TILE_N, C) bf16
    # Leading-axis reduce = 7 lane-dense VPU maxes; bf16 max is exact (no upcast needed).
    o_ref[...] = jnp.max(x_ref[...], axis=0)


def pooled_max(x, tile_n):
    """x: [8, N_pad, C] -> [N_pad, C] (sparse max-pool reduction, offset-major layout)."""
    kk, n_pad, c = x.shape
    return pl.pallas_call(
        _maxpool_kernel,
        out_shape=jax.ShapeDtypeStruct((n_pad, c), x.dtype),
        grid_spec=pltpu.PrefetchScalarGridSpec(
            num_scalar_prefetch=0,
            grid=(n_pad // tile_n,),
            in_specs=[pl.BlockSpec((kk, tile_n, c), lambda i: (0, i, 0))],
            out_specs=pl.BlockSpec((tile_n, c), lambda i: (i, 0)),
        ),
        compiler_params=pltpu.CompilerParams(
            dimension_semantics=("parallel",),
            vmem_limit_bytes=_VMEM_LIMIT,
            allow_input_fusion=[True],
        ),
    )(x)


# ------------------ host-side index building (vectorized numpy) ------------------

def _coord_keys(coords, spatial_shape):
    """Collision-free int64 key per (b,z,y,x), with +-1 halo room on every spatial axis."""
    D, H, W = spatial_shape
    c = np.asarray(coords, dtype=np.int64)
    sx = 1
    sy = W + 2
    sz = (H + 2) * (W + 2)
    sb = (D + 2) * sz
    keys = c[:, 0] * sb + (c[:, 1] + 1) * sz + (c[:, 2] + 1) * sy + (c[:, 3] + 1) * sx
    return keys, (sz, sy, sx)


def _make_lookup(coords, spatial_shape):
    keys, strides = _coord_keys(coords, spatial_shape)
    order = np.argsort(keys)
    skeys = keys[order]

    def lookup(query_keys):
        pos = np.searchsorted(skeys, query_keys)
        pos_c = np.minimum(pos, skeys.shape[0] - 1)
        hit = skeys[pos_c] == query_keys
        return np.where(hit, order[pos_c], -1).astype(np.int32)

    return keys, strides, lookup


def build_subm_neighbor_map(coords, spatial_shape):
    """coords [N,4] int -> neighbor map [N,27] (row index, -1 if the neighbor is inactive)."""
    n = coords.shape[0]
    keys, (sz, sy, sx), lookup = _make_lookup(coords, spatial_shape)
    nbr = np.empty((n, 27), dtype=np.int32)
    k = 0
    for dz in (-1, 0, 1):
        for dy in (-1, 0, 1):
            for dx in (-1, 0, 1):
                nbr[:, k] = lookup(keys + dz * sz + dy * sy + dx * sx)
                k += 1
    return nbr


def build_pool_map(coords, spatial_shape):
    """2x2x2/stride-2 sparse max-pool map -> (out_coords [M,4], pool_map [M,8], out_shape)."""
    oc = coords.copy()
    oc[:, 1:] = oc[:, 1:] // 2
    out_coords = np.unique(oc, axis=0).astype(np.int32)
    _, _, lookup = _make_lookup(coords, spatial_shape)
    m = out_coords.shape[0]
    pool_map = np.empty((m, 8), dtype=np.int32)
    child = np.empty((m, 4), dtype=np.int64)
    child[:, 0] = out_coords[:, 0]
    k = 0
    for dz in (0, 1):
        for dy in (0, 1):
            for dx in (0, 1):
                child[:, 1] = 2 * out_coords[:, 1] + dz
                child[:, 2] = 2 * out_coords[:, 2] + dy
                child[:, 3] = 2 * out_coords[:, 3] + dx
                qkeys, _ = _coord_keys(child, spatial_shape)
                pool_map[:, k] = lookup(qkeys)
                k += 1
    out_shape = tuple(s // 2 for s in spatial_shape)
    return out_coords, pool_map, out_shape


# ----------------------------- jitted layer bodies -----------------------------

@functools.partial(jax.jit, static_argnames=("tile_n", "n_out"))
def _conv_device(feats, idx, w2d, *, tile_n, n_out):
    # feats [n, cin_pad] bf16, idx [n_pad, 27] int32 (sentinel -> zero row), w2d [27*cin_pad, cout_pad]
    n_pad, kk = idx.shape
    cin = feats.shape[1]
    feat_pad = jnp.concatenate([feats, jnp.zeros((1, cin), feats.dtype)], axis=0)
    x = jnp.take(feat_pad, idx, axis=0).reshape(n_pad, kk * cin)   # fused into pallas input
    out = gathered_matmul(x, w2d, tile_n)
    return out[:n_out]


@functools.partial(jax.jit, static_argnames=("tile_n", "n_out"))
def _pool_device(feats, idx_t, *, tile_n, n_out):
    # feats [n, c] bf16, idx_t [8, n_pad] int32 (sentinel -> -inf row)
    n, c = feats.shape
    feat_pad = jnp.concatenate([feats, jnp.full((1, c), NEG, feats.dtype)], axis=0)
    gathered = jnp.take(feat_pad, idx_t, axis=0)                   # [8, n_pad, c]
    return pooled_max(gathered, tile_n)[:n_out]


# ----------------------------- layer wrappers -----------------------------

def subm_conv(features, nbr_map, w2d):
    """Submanifold 3x3x3 conv (no bias). features [N,Cin_pad] bf16, w2d [27*Cin_pad, Cout_pad]."""
    n = features.shape[0]
    k, cout = w2d.shape
    tile_n = _gemm_tile_n(n, k, cout)
    n_pad = _round_up(max(n, 1), tile_n)

    # Pad the *index map*, not the gathered tensor: missing neighbors and pad rows both point
    # at the all-zero row n, so the 27x-inflated stream is generated once (and fused).
    idx = np.where(nbr_map < 0, n, nbr_map).astype(np.int32)
    idx = np.pad(idx, ((0, n_pad - n), (0, 0)), constant_values=n)
    return _conv_device(features, jnp.asarray(idx), w2d, tile_n=tile_n, n_out=n)


def sparse_maxpool(features, pool_map):
    """Sparse 2x2x2 max pool. features [N,C] bf16, pool_map [M,8] -> [M,C] bf16."""
    n, c = features.shape
    n_out = pool_map.shape[0]
    tile_n = _pool_tile_n(n_out, c)
    n_pad = _round_up(max(n_out, 1), tile_n)

    idx = np.where(pool_map < 0, n, pool_map).astype(np.int32)      # missing -> -inf row
    idx = np.pad(idx, ((0, n_pad - n_out), (0, 0)), constant_values=n)
    idx_t = np.ascontiguousarray(idx.T)                             # offset-major [8, n_pad]
    return _pool_device(features, jnp.asarray(idx_t), tile_n=tile_n, n_out=n_out)


# --------------------------------- the Net ---------------------------------

# (Cin, Cout) of the 14 SubMConv3d layers, grouped in pairs sharing an indice_key.
CHANNELS = [(3, 64), (64, 64),
            (64, 96), (96, 96),
            (96, 128), (128, 128),
            (128, 160), (160, 160),
            (160, 192), (192, 192),
            (192, 224), (224, 224),
            (224, 256), (256, 256)]


def init_weights(key):
    weights = []
    for cin, cout in CHANNELS:
        key, sub = jax.random.split(key)
        std = (2.0 / (27 * cin)) ** 0.5
        weights.append(jax.random.normal(sub, (27, cin, cout), jnp.float32) * std)
    return weights


def prepare_weights(weights):
    """Once, outside the forward pass: pad channels, cast to bf16, reshape to [27*Cin_p, Cout_p]."""
    prepared = []
    for w in weights:
        _, cin, cout = w.shape
        cin_p, cout_p = _pad_c(cin), _pad_c(cout)
        wb = jnp.asarray(w, jnp.bfloat16)
        wb = jnp.pad(wb, ((0, 0), (0, cin_p - cin), (0, cout_p - cout)))
        prepared.append(wb.reshape(27 * cin_p, cout_p))
    return prepared


def net_forward(features, coords_np, prepared_weights, spatial_shape):
    """Equivalent of Net.forward: returns final sparse tensor (features [M,256], coords [M,4])."""
    feats = features.astype(jnp.bfloat16)   # activations in bf16; GEMMs accumulate in f32
    coords = coords_np
    shape = spatial_shape
    wi = 0
    for blk in range(7):
        nbr = build_subm_neighbor_map(coords, shape)   # shared indice_key 'c{blk}'
        feats = subm_conv(feats, nbr, prepared_weights[wi]); wi += 1
        feats = subm_conv(feats, nbr, prepared_weights[wi]); wi += 1
        if blk < 6:                                    # 6 SparseMaxPool3d layers
            out_coords, pool_map, shape = build_pool_map(coords, shape)
            feats = sparse_maxpool(feats, pool_map)
            coords = out_coords
    # Slice off any channel padding (a no-op for the 256-wide final layer).
    feats = feats[:, :CHANNELS[-1][1]]
    return feats.astype(jnp.float32), coords


if __name__ == "__main__":
    key = jax.random.PRNGKey(0)
    kc, kf, kw = jax.random.split(key, 3)

    # spatial shape divisible by 2**6 so all six max-pools stay valid
    shape = (64, 64, 64)
    n_raw = 200

    zyx = np.asarray(jax.random.randint(kc, (n_raw, 3), 0, shape[0], dtype=jnp.int32))
    coords_np = np.unique(
        np.concatenate([np.zeros((n_raw, 1), np.int32), zyx.astype(np.int32)], axis=1), axis=0)
    n = coords_np.shape[0]

    features = jax.random.normal(kf, (n, 3), dtype=jnp.float32)
    weights = init_weights(kw)
    prepared = prepare_weights(weights)

    out_feats, out_coords = net_forward(features, coords_np, prepared, shape)
    out_feats = jax.block_until_ready(out_feats)
    assert out_feats.shape[1] == 256 and out_feats.shape[0] == out_coords.shape[0]
    print("KERNEL_OK")
</pallas_src>

<mosaic_0001>
module attributes {stable_mosaic.version = 11 : i64} {
  func.func @_conv_matmul_kernel(%arg0: i32, %arg1: memref<128x81xbf16, #tpu.memory_space<vmem>>, %arg2: memref<81x64xbf16, #tpu.memory_space<vmem>>, %arg3: memref<128x64xbf16, #tpu.memory_space<vmem>>) attributes {dimension_semantics = [#tpu.dimension_semantics<parallel>], iteration_bounds = array<i64: 2>, scalar_prefetch = 0 : i64, scratch_operands = 0 : i64, tpu.core_type = #tpu.core_type<tc>, window_params = [{transform_indices = @transform_0, window_bounds = array<i64: 128, 81>}, {pipeline_mode = #tpu.pipeline_mode<synchronous>, transform_indices = @transform_1, window_bounds = array<i64: 81, 64>}, {transform_indices = @transform_2, window_bounds = array<i64: 128, 64>}]} {
    %c0 = arith.constant 0 : index
    %c0_0 = arith.constant 0 : index
    %0 = vector.load %arg1[%c0, %c0_0] : memref<128x81xbf16, #tpu.memory_space<vmem>>, vector<128x81xbf16>
    %c0_1 = arith.constant 0 : index
    %c0_2 = arith.constant 0 : index
    %1 = vector.load %arg2[%c0_1, %c0_2] : memref<81x64xbf16, #tpu.memory_space<vmem>>, vector<81x64xbf16>
    %cst = arith.constant dense<0.000000e+00> : vector<128x64xf32>
    %2 = tpu.matmul %0, %1, %cst {dimension_numbers = #tpu.dot_dimension_numbers<[1], [0], [0], [1], [0, 0, 1, 1], [], []>} : vector<128x81xbf16>, vector<81x64xbf16>, vector<128x64xf32> -> vector<128x64xf32>
    %3 = arith.truncf %2 : vector<128x64xf32> to vector<128x64xbf16>
    %c0_3 = arith.constant 0 : index
    %c0_4 = arith.constant 0 : index
    %4 = vector.load %arg3[%c0_3, %c0_4] : memref<128x64xbf16, #tpu.memory_space<vmem>>, vector<128x64xbf16>
    tpu.vector_store %arg3[%c0_3, %c0_4], %3 {strides = array<i32>} : memref<128x64xbf16, #tpu.memory_space<vmem>>, vector<128x64xbf16>,
    return
  }
  func.func @transform_0(%arg0: i32) -> (i32, i32) {
    %c0_i32 = arith.constant 0 : i32
    %c0_i32_0 = arith.constant 0 : i32
    return %arg0, %c0_i32 : i32, i32
  }
  func.func @transform_1(%arg0: i32) -> (i32, i32) {
    %c0_i32 = arith.constant 0 : i32
    %c0_i32_0 = arith.constant 0 : i32
    %c0_i32_1 = arith.constant 0 : i32
    return %c0_i32, %c0_i32_0 : i32, i32
  }
  func.func @transform_2(%arg0: i32) -> (i32, i32) {
    %c0_i32 = arith.constant 0 : i32
    %c0_i32_0 = arith.constant 0 : i32
    return %arg0, %c0_i32 : i32, i32
  }
}

</mosaic_0001>

<llo_original>
// kernel: _conv_device.1
$region0: #{_conv_device.1}
  #allocation0 [shape = 'u32[]', space=smem, size = 0x4, offset = 0x4, fixed_abs, tag = 'smem constant byte address 0x4 - core index']
  #allocation1 [shape = 'u32[144,128]{1,0:T(1,128)}', space=vmem, size = 0x12000, scoped, tag = 'internal scratch']
  %s0 = inlined_call_operand.vmem [shape: bf16[256,81], index: 0, kind: input, shape index: {}]
  %s1 = inlined_call_operand.vmem [shape: bf16[81,64], index: 1, kind: input, shape index: {}]
  %s2 = inlined_call_operand.vmem [shape: bf16[256,64], index: 2, kind: output, shape index: {}]
  %s3 = sld [smem:[#allocation0]]
  $region41: #{_conv_device.1} parent=0
    _
  %s5 = ssub.s32 1, %s3
  %s6 = scalar_select 0, %s5, %s3
  loop: start=0, step=1, limit=4
  $region2: #{_conv_device.1} parent=0 // loop_pre_header
    _
  $region3: #{_conv_device.1} parent=0 // loop_header
    %s8 = sphi 0, %s12
    %p9 = scmp.ge.s32.totalorder %s8, 4
    %s18 = sphi 0, %s20
    %s21 = sphi 0, %s18
    %s22 = sphi 0, %s21
    %s38 = sphi 0, %s22
    %s42 = sphi 0, %s42
    %s44 = sphi 0, %s42
    %s45 = sphi 0, %s44
    %s59 = sphi 0, %s45
    %s65 = sphi 0, %s67
    %s68 = sphi 0, %s65
    %s69 = sphi 0, %s68
    %s85 = sphi 0, %s69
  $region4: #{_conv_device.1} parent=0 // loop_header_branch
    %11 = sbr.rel (%p9) target = $region8
  $region5: #{_conv_device.1} parent=0 // loop_body
    %s13 = ssub.s32 %s8, 1
    %s14 = ssub.s32 %s8, 2
    %s15 = sadd.s32 %s8, 1
    %s16 = ssub.s32 %s8, %s15
    %p17 = scmp.eq.s32.totalorder %s16, 0
    %s19 = sadd.s32 %s18, 1
    %s20 = scalar_select %p17, %s18, %s19
    %p23 = pneg %p17
    %p24 = scmp.eq.s32.totalorder %s8, 1
    %p25 = por %p23, %p24
    %p26 = scmp.ne.s32.totalorder %s18, %s21
    %p27 = scmp.eq.s32.totalorder %s8, 0
    %p28 = por %p26, %p27
    %p29 = scmp.ne.s32.totalorder %s18, %s21
    %p30 = scmp.eq.s32.totalorder %s13, 1
    %p31 = por %p29, %p30
    %p32 = scmp.ne.s32.totalorder %s21, %s22
    %p33 = scmp.eq.s32.totalorder %s13, 0
    %p34 = por %p32, %p33
    %p35 = scmp.ne.s32.totalorder %s21, %s22
    %p36 = scmp.eq.s32.totalorder %s14, 1
    %p37 = por %p35, %p36
    %p39 = scmp.ne.s32.totalorder %s22, %s38
    %p40 = scmp.eq.s32.totalorder %s14, 0
    %p41 = por %p39, %p40
    %s43 = sadd.s32 %s42, 1
    %p46 = scmp.eq.s32.totalorder %s8, 1
    %p47 = scmp.ne.s32.totalorder %s42, %s44
    %p48 = scmp.eq.s32.totalorder %s8, 0
    %p49 = por %p47, %p48
    %p50 = scmp.ne.s32.totalorder %s42, %s44
    %p51 = scmp.eq.s32.totalorder %s13, 1
    %p52 = por %p50, %p51
    %p53 = scmp.ne.s32.totalorder %s44, %s45
    %p54 = scmp.eq.s32.totalorder %s13, 0
    %p55 = por %p53, %p54
    %p56 = scmp.ne.s32.totalorder %s44, %s45
    %p57 = scmp.eq.s32.totalorder %s14, 1
    %p58 = por %p56, %p57
    %p60 = scmp.ne.s32.totalorder %s45, %s59
    %p61 = scmp.eq.s32.totalorder %s14, 0
    %p62 = por %p60, %p61
    %s63 = ssub.s32 %s8, %s15
    %p64 = scmp.eq.s32.totalorder %s63, 0
    %s66 = sadd.s32 %s65, 1
    %s67 = scalar_select %p64, %s65, %s66
    %p70 = pneg %p64
    %p71 = scmp.eq.s32.totalorder %s8, 1
    %p72 = por %p70, %p71
    %p73 = scmp.ne.s32.totalorder %s65, %s68
    %p74 = scmp.eq.s32.totalorder %s8, 0
    %p75 = por %p73, %p74
    %p76 = scmp.ne.s32.totalorder %s65, %s68
    %p77 = scmp.eq.s32.totalorder %s13, 1
    %p78 = por %p76, %p77
    %p79 = scmp.ne.s32.totalorder %s68, %s69
    %p80 = scmp.eq.s32.totalorder %s13, 0
    %p81 = por %p79, %p80
    %p82 = scmp.ne.s32.totalorder %s68, %s69
    %p83 = scmp.eq.s32.totalorder %s14, 1
    %p84 = por %p82, %p83
    %p86 = scmp.ne.s32.totalorder %s69, %s85
    %p87 = scmp.eq.s32.totalorder %s14, 0
    %p88 = por %p86, %p87
    %p89 = scmp.le.s32.totalorder 1, %s8
    %p90 = scmp.lt.s32.totalorder %s8, 3
    %p91 = pnand %p89, %p90
    %p92 = pneg %p91
    // Predicated region
    $region9: #{_conv_device.1} parent=5 // pred_check
      _
    $region10: #{_conv_device.1} parent=5 // pred_check_branch
      %94 = sbr.rel (%p91) target = $region12
    $region11: #{_conv_device.1} parent=5 // pred_region
      %s95 = ssub.s32 %s8, 1
      // Predicated region
      $region13: #{_conv_device.1} parent=11 // pred_check
        %p96 = pneg %p55
      $region14: #{_conv_device.1} parent=11 // pred_check_branch
        %98 = sbr.rel (%p96) target = $region16
      $region15: #{_conv_device.1} parent=11 // pred_region
        _
      $region16: #{_conv_device.1} parent=11 // pred_fallthru
        _
    $region12: #{_conv_device.1} parent=5 // pred_fallthru
      _
    %p99 = scmp.lt.s32.totalorder %s8, 2
    // Predicated region
    $region17: #{_conv_device.1} parent=5 // pred_check
      %p100 = pneg %p99
    $region18: #{_conv_device.1} parent=5 // pred_check_branch
      %102 = sbr.rel (%p100) target = $region20
    $region19: #{_conv_device.1} parent=5 // pred_region
      // Predicated region
      $region21: #{_conv_device.1} parent=19 // pred_check
        %p103 = pneg %p28
      $region22: #{_conv_device.1} parent=19 // pred_check_branch
        %105 = sbr.rel (%p103) target = $region24
      $region23: #{_conv_device.1} parent=19 // pred_region
        %s106 = smul.u32 16, %s8
        %p107 = scmp.lt.s32.totalorder %s106, 31
        %s108 = scalar_select %p107, %s106, 31
        %s109 = smul.addr %s108, 4
        %s110 = scalar_lea.vmem %s0, %s109
        %s111 = smul.u32 16, %s8
      $region24: #{_conv_device.1} parent=19 // pred_fallthru
        _
    $region20: #{_conv_device.1} parent=5 // pred_fallthru
      _
    %p112 = scmp.le.s32.totalorder 1, %s8
    %p113 = scmp.lt.s32.totalorder %s8, 3
    %p114 = pnand %p112, %p113
    %p115 = pneg %p114
    // Predicated region
    $region25: #{_conv_device.1} parent=5 // pred_check
      _
    $region26: #{_conv_device.1} parent=5 // pred_check_branch
      %117 = sbr.rel (%p114) target = $region28
    $region27: #{_conv_device.1} parent=5 // pred_region
      %s118 = ssub.s32 %s8, 1
      %s119 = smul.u32 16, %s13
      %p120 = scmp.lt.s32.totalorder %s119, 31
      %s121 = scalar_select %p120, %s119, 31
      %s122 = smul.addr %s121, 4
      %s123 = scalar_lea.vmem %s0, %s122
      %p124 = pneg %p34
      %p125 = pneg %p31
      %p126 = pneg %p55
      %p127 = pneg %p52
      %p128 = pneg %p81
      %p129 = pneg %p78
      %s130 = smul.u32 16, %s13
      %p131 = scmp.lt.s32.totalorder %s130, 31
      %s132 = scalar_select %p131, %s130, 31
      %s133 = smul.addr %s132, 4
      %s134 = scalar_lea.vmem %s2, %s133
      %s135 = smul.u32 16, %s13
      %p136 = scmp.lt.s32.totalorder %s135, 31
      %s137 = scalar_select %p136, %s135, 31
      %s138 = smul.addr %s137, 4
      %s139 = scalar_lea.vmem %s0, %s138
      %s140 = smul.u32 16, %s13
      %s141 = smul.u32 16, %s13
      %p142 = scmp.lt.s32.totalorder %s141, 31
      %s143 = scalar_select %p142, %s141, 31
      %s144 = smul.addr %s143, 4
      %s145 = scalar_lea.vmem %s2, %s144
      %s146 = smul.u32 16, %s13
      %v148 = vld [vmem:[%s139] sm:$0xf]
      %v149 = vld [vmem:[%s139 + $0x4] sm:$0xf]
      %v150 = vld [vmem:[%s139 + $0x8] sm:$0xf]
      %v151 = vld [vmem:[%s139 + $0xc] sm:$0xf]
      %v152 = vld [vmem:[%s139 + $0x10] sm:$0xf]
      %v153 = vld [vmem:[%s139 + $0x14] sm:$0xf]
      %v154 = vld [vmem:[%s139 + $0x18] sm:$0xf]
      %v155 = vld [vmem:[%s139 + $0x1c] sm:$0xf]
      %v156 = vld [vmem:[%s139 + $0x20] sm:$0xf]
      %v157 = vld [vmem:[%s139 + $0x24] sm:$0xf]
      %v158 = vld [vmem:[%s139 + $0x28] sm:$0xf]
      %v159 = vld [vmem:[%s139 + $0x2c] sm:$0xf]
      %v160 = vld [vmem:[%s139 + $0x30] sm:$0xf]
      %v161 = vld [vmem:[%s139 + $0x34] sm:$0xf]
      %v162 = vld [vmem:[%s139 + $0x38] sm:$0xf]
      %v163 = vld [vmem:[%s139 + $0x3c] sm:$0xf]
      %v164 = vld [vmem:[%s1] sm:$0xf]
      %v165 = vld [vmem:[%s1 + $0x4] sm:$0xf]
      %v166 = vld [vmem:[%s1 + $0x8] sm:$0xf]
      %v167 = vld [vmem:[%s1 + $0xc] sm:$0xf]
      %v168 = vld [vmem:[%s1 + $0x10] sm:$0xf]
      %v169 = vld [vmem:[%s1 + $0x14] sm:$0xf]
      %v170 = vld [vmem:[%s1 + $0x18] sm:$0xf]
      %v171 = vld [vmem:[%s1 + $0x1c] sm:$0xf]
      %v172 = vld [vmem:[%s1 + $0x20] sm:$0xf]
      %v173 = vld [vmem:[%s1 + $0x24] sm:$0xf]
      %v174 = vld [vmem:[%s1 + $0x28] sm:$0x1]
      %v191 = vunpack.c.l.b16 %v148
      %v192 = vunpack.c.l.b16 %v149
      %v193 = vunpack.c.l.b16 %v150
      %v194 = vunpack.c.l.b16 %v151
      %v195 = vunpack.c.l.b16 %v152
      %v196 = vunpack.c.l.b16 %v153
      %v197 = vunpack.c.l.b16 %v154
      %v198 = vunpack.c.l.b16 %v155
      %v199 = vunpack.c.l.b16 %v156
      %v200 = vunpack.c.l.b16 %v157
      %v201 = vunpack.c.l.b16 %v158
      %v202 = vunpack.c.l.b16 %v159
      %v203 = vunpack.c.l.b16 %v160
      %v204 = vunpack.c.l.b16 %v161
      %v205 = vunpack.c.l.b16 %v162
      %v206 = vunpack.c.l.b16 %v163
      %v207 = vpack.c.b16 %v192, %v191
      %v208 = vpack.c.b16 %v194, %v193
      %v209 = vpack.c.b16 %v196, %v195
      %v210 = vpack.c.b16 %v198, %v197
      %v211 = vpack.c.b16 %v200, %v199
      %v212 = vpack.c.b16 %v202, %v201
      %v213 = vpack.c.b16 %v204, %v203
      %v214 = vpack.c.b16 %v206, %v205
      %v226 = vunpack.c.l.b16 %v164
      %v227 = vunpack.c.l.b16 %v165
      %v228 = vunpack.c.l.b16 %v166
      %v229 = vunpack.c.l.b16 %v167
      %v230 = vunpack.c.l.b16 %v168
      %v231 = vunpack.c.l.b16 %v169
      %v232 = vunpack.c.l.b16 %v170
      %v233 = vunpack.c.l.b16 %v171
      %v234 = vunpack.c.l.b16 %v172
      %v235 = vunpack.c.l.b16 %v173
      %v236 = vunpack.c.l.b16 %v174
      %v237 = vpack.c.b16 %v227, %v226
      %v238 = vpack.c.b16 %v229, %v228
      %v239 = vpack.c.b16 %v231, %v230
      %v240 = vpack.c.b16 %v233, %v232
      %v241 = vpack.c.b16 %v235, %v234
      %v242 = vpack.c.b16 %v236, %v236
      %vm248 = vcmask 662528
      %v250 = vsel %vm248, %v207, 0
      %v253 = vsel %vm248, %v208, 0
      %v256 = vsel %vm248, %v209, 0
      %v259 = vsel %vm248, %v210, 0
      %v262 = vsel %vm248, %v211, 0
      %v265 = vsel %vm248, %v212, 0
      %v268 = vsel %vm248, %v213, 0
      %v271 = vsel %vm248, %v214, 0
      %vm273 = vcmask 1040384
      %v274 = vsel 0, 4294967295, 65535
      %v275 = vsel %vm273, %v274, 0
      %v277 = vand.u32 %v242, %v275
      %279 = vmatprep.subr.bf16.mxu0 0
      %280 = vmatpush1.bf16.msra.mxu0 0
      %281 = vmatprep.subr.bf16.mxu0 0
      %282 = vmatpush1.bf16.msra.mxu0 0
      %283 = vmatprep.subr.bf16.mxu0 0
      %284 = vmatpush1.bf16.msra.mxu0 %v277
      %285 = vmatprep.subr.bf16.mxu0 0
      %286 = vmatpush1.bf16.msra.mxu0 %v241
      %287 = vmatprep.subr.bf16.mxu0 0
      %288 = vmatpush1.bf16.msra.mxu0 %v240
      %289 = vmatprep.subr.bf16.mxu0 0
      %290 = vmatpush1.bf16.msra.mxu0 %v239
      %291 = vmatprep.subr.bf16.mxu0 0
      %292 = vmatpush1.bf16.msra.mxu0 %v238
      %293 = vmatprep.subr.bf16.mxu0 0
      %294 = vmatpush1.bf16.msra.mxu0 %v237
      %295 = vmatprep.subr.bf16.mxu0 0
      %296 = vmatpush2.bf16.msra.mxu0 0
      %297 = vmatprep.subr.bf16.mxu0 0
      %298 = vmatpush2.bf16.msra.mxu0 0
      %299 = vmatprep.subr.bf16.mxu0 0
      %300 = vmatpush2.bf16.msra.mxu0 0
      %301 = vmatprep.subr.bf16.mxu0 0
      %302 = vmatpush2.bf16.msra.mxu0 0
      %303 = vmatprep.subr.bf16.mxu0 0
      %304 = vmatpush2.bf16.msra.mxu0 0
      %305 = vmatprep.subr.bf16.mxu0 0
      %306 = vmatpush2.bf16.msra.mxu0 0
      %307 = vmatprep.subr.bf16.mxu0 0
      %308 = vmatpush2.bf16.msra.mxu0 0
      %309 = vmatprep.subr.bf16.mxu0 0
      %310 = vmatpush2.bf16.msra.mxu0 0
      %311 = vmatprep.mubr.bf16.mxu0 0
      %312 = vmatmul.mubr.bf16.gmra.mxu0 %v250
      %v313 = vpop.f32.mrf.mxu0
      %v314 = vadd.f32 0.0, %v313
      %v315 = vpop.f32.mrf.mxu0
      %v316 = vpop.f32.mrf.mxu0
      %v317 = vadd.f32 0.0, %v316
      %v318 = vpop.f32.mrf.mxu0
      %319 = vmatprep.mubr.bf16.mxu0 0
      %320 = vmatmul.mubr.bf16.gmra.mxu0 %v253
      %v321 = vpop.f32.mrf.mxu0
      %v322 = vadd.f32 0.0, %v321
      %v323 = vpop.f32.mrf.mxu0
      %v324 = vpop.f32.mrf.mxu0
      %v325 = vadd.f32 0.0, %v324
      %v326 = vpop.f32.mrf.mxu0
      %327 = vmatprep.mubr.bf16.mxu0 0
      %328 = vmatmul.mubr.bf16.gmra.mxu0 %v256
      %v329 = vpop.f32.mrf.mxu0
      %v330 = vadd.f32 0.0, %v329
      %v331 = vpop.f32.mrf.mxu0
      %v332 = vpop.f32.mrf.mxu0
      %v333 = vadd.f32 0.0, %v332
      %v334 = vpop.f32.mrf.mxu0
      %335 = vmatprep.mubr.bf16.mxu0 0
      %336 = vmatmul.mubr.bf16.gmra.mxu0 %v259
      %v337 = vpop.f32.mrf.mxu0
      %v338 = vadd.f32 0.0, %v337
      %v339 = vpop.f32.mrf.mxu0
      %v340 = vpop.f32.mrf.mxu0
      %v341 = vadd.f32 0.0, %v340
      %v342 = vpop.f32.mrf.mxu0
      %343 = vmatprep.mubr.bf16.mxu0 0
      %344 = vmatmul.mubr.bf16.gmra.mxu0 %v262
      %v345 = vpop.f32.mrf.mxu0
      %v346 = vadd.f32 0.0, %v345
      %v347 = vpop.f32.mrf.mxu0
      %v348 = vpop.f32.mrf.mxu0
      %v349 = vadd.f32 0.0, %v348
      %v350 = vpop.f32.mrf.mxu0
      %351 = vmatprep.mubr.bf16.mxu0 0
      %352 = vmatmul.mubr.bf16.gmra.mxu0 %v265
      %v353 = vpop.f32.mrf.mxu0
      %v354 = vadd.f32 0.0, %v353
      %v355 = vpop.f32.mrf.mxu0
      %v356 = vpop.f32.mrf.mxu0
      %v357 = vadd.f32 0.0, %v356
      %v358 = vpop.f32.mrf.mxu0
      %359 = vmatprep.mubr.bf16.mxu0 0
      %360 = vmatmul.mubr.bf16.gmra.mxu0 %v268
      %v361 = vpop.f32.mrf.mxu0
      %v362 = vadd.f32 0.0, %v361
      %v363 = vpop.f32.mrf.mxu0
      %v364 = vpop.f32.mrf.mxu0
      %v365 = vadd.f32 0.0, %v364
      %v366 = vpop.f32.mrf.mxu0
      %367 = vmatprep.mubr.bf16.mxu0 0
      %368 = vmatmul.mubr.bf16.gmra.mxu0 %v271
      %v369 = vpop.f32.mrf.mxu0
      %v370 = vadd.f32 0.0, %v369
      %v371 = vpop.f32.mrf.mxu0
      %v372 = vpop.f32.mrf.mxu0
      %v373 = vadd.f32 0.0, %v372
      %v374 = vpop.f32.mrf.mxu0
      %375 = vdwg.mxu0
      %v376 = vpack.c.bf16 %v317, %v314
      %v377 = vpack.c.bf16 %v325, %v322
      %v378 = vpack.c.bf16 %v333, %v330
      %v379 = vpack.c.bf16 %v341, %v338
      %v380 = vpack.c.bf16 %v349, %v346
      %v381 = vpack.c.bf16 %v357, %v354
      %v382 = vpack.c.bf16 %v365, %v362
      %v383 = vpack.c.bf16 %v373, %v370
      %v392 = vunpack.c.l.b16 %v376
      %v393 = vunpack.c.h.b16 %v376
      %v394 = vunpack.c.l.b16 %v377
      %v395 = vunpack.c.h.b16 %v377
      %v396 = vunpack.c.l.b16 %v378
      %v397 = vunpack.c.h.b16 %v378
      %v398 = vunpack.c.l.b16 %v379
      %v399 = vunpack.c.h.b16 %v379
      %v400 = vunpack.c.l.b16 %v380
      %v401 = vunpack.c.h.b16 %v380
      %v402 = vunpack.c.l.b16 %v381
      %v403 = vunpack.c.h.b16 %v381
      %v404 = vunpack.c.l.b16 %v382
      %v405 = vunpack.c.h.b16 %v382
      %v406 = vunpack.c.l.b16 %v383
      %v407 = vunpack.c.h.b16 %v383
      %v408 = vpack.c.b16 %v392, %v392
      %v409 = vpack.c.b16 %v393, %v393
      %v410 = vpack.c.b16 %v394, %v394
      %v411 = vpack.c.b16 %v395, %v395
      %v412 = vpack.c.b16 %v396, %v396
      %v413 = vpack.c.b16 %v397, %v397
      %v414 = vpack.c.b16 %v398, %v398
      %v415 = vpack.c.b16 %v399, %v399
      %v416 = vpack.c.b16 %v400, %v400
      %v417 = vpack.c.b16 %v401, %v401
      %v418 = vpack.c.b16 %v402, %v402
      %v419 = vpack.c.b16 %v403, %v403
      %v420 = vpack.c.b16 %v404, %v404
      %v421 = vpack.c.b16 %v405, %v405
      %v422 = vpack.c.b16 %v406, %v406
      %v423 = vpack.c.b16 %v407, %v407
      %vm440 = vcmask 519168
      %441 = vst.msk [vmem:[%s145] sm:$0xf] %vm440, %v408
      %442 = vst.msk [vmem:[%s145 + $0x4] sm:$0xf] %vm440, %v409
      %443 = vst.msk [vmem:[%s145 + $0x8] sm:$0xf] %vm440, %v410
      %444 = vst.msk [vmem:[%s145 + $0xc] sm:$0xf] %vm440, %v411
      %445 = vst.msk [vmem:[%s145 + $0x10] sm:$0xf] %vm440, %v412
      %446 = vst.msk [vmem:[%s145 + $0x14] sm:$0xf] %vm440, %v413
      %447 = vst.msk [vmem:[%s145 + $0x18] sm:$0xf] %vm440, %v414
      %448 = vst.msk [vmem:[%s145 + $0x1c] sm:$0xf] %vm440, %v415
      %449 = vst.msk [vmem:[%s145 + $0x20] sm:$0xf] %vm440, %v416
      %450 = vst.msk [vmem:[%s145 + $0x24] sm:$0xf] %vm440, %v417
      %451 = vst.msk [vmem:[%s145 + $0x28] sm:$0xf] %vm440, %v418
      %452 = vst.msk [vmem:[%s145 + $0x2c] sm:$0xf] %vm440, %v419
      %453 = vst.msk [vmem:[%s145 + $0x30] sm:$0xf] %vm440, %v420
      %454 = vst.msk [vmem:[%s145 + $0x34] sm:$0xf] %vm440, %v421
      %455 = vst.msk [vmem:[%s145 + $0x38] sm:$0xf] %vm440, %v422
      %456 = vst.msk [vmem:[%s145 + $0x3c] sm:$0xf] %vm440, %v423
      %s457 = smul.u32 16, %s13
      %p458 = scmp.lt.s32.totalorder %s457, 31
      %s459 = scalar_select %p458, %s457, 31
      %s460 = smul.addr %s459, 4
      %s461 = scalar_lea.vmem %s2, %s460
      // Predicated region
      $region29: #{_conv_device.1} parent=27 // pred_check
        %p462 = pneg %p78
      $region30: #{_conv_device.1} parent=27 // pred_check_branch
        %464 = sbr.rel (%p462) target = $region32
      $region31: #{_conv_device.1} parent=27 // pred_region
        %s465 = smul.u32 16, %s13
      $region32: #{_conv_device.1} parent=27 // pred_fallthru
        _
    $region28: #{_conv_device.1} parent=5 // pred_fallthru
      _
    %p466 = scmp.le.s32.totalorder 2, %s8
    // Predicated region
    $region33: #{_conv_device.1} parent=5 // pred_check
      %p467 = pneg %p466
    $region34: #{_conv_device.1} parent=5 // pred_check_branch
      %469 = sbr.rel (%p467) target = $region36
    $region35: #{_conv_device.1} parent=5 // pred_region
      %s470 = ssub.s32 %s8, 2
      // Predicated region
      $region37: #{_conv_device.1} parent=35 // pred_check
        %p471 = pneg %p84
      $region38: #{_conv_device.1} parent=35 // pred_check_branch
        %473 = sbr.rel (%p471) target = $region40
      $region39: #{_conv_device.1} parent=35 // pred_region
        %s474 = smul.u32 16, %s14
        %p475 = scmp.lt.s32.totalorder %s474, 31
        %s476 = scalar_select %p475, %s474, 31
        %s477 = smul.addr %s476, 4
        %s478 = scalar_lea.vmem %s2, %s477
      $region40: #{_conv_device.1} parent=35 // pred_fallthru
        _
    $region36: #{_conv_device.1} parent=5 // pred_fallthru
      _
  $region6: #{_conv_device.1} parent=0 // loop_footer
    %s12 = sadd.s32 1, %s8
  $region7: #{_conv_device.1} parent=0 // loop_footer_branch
    %7 = sbr.rel target = $region3
  $region8: #{_conv_device.1} parent=0 // loop_exit
    _

</llo_original>
